<compile_context>
chip_gen: v5e
topology: v5e:2x2
jax: 0.10.0
libtpu: 0.0.40
codegen_flags: <defaults>
</compile_context>

<pallas_src>
import jax
import jax.numpy as jnp
from jax.experimental import pallas as pl
from jax.experimental.pallas import tpu as pltpu

_SUBLANE = 8       # second-to-last-dim granularity for f32 tiles
_MAX_TN = 8192     # row-tile cap; see header comment (step-overhead amortization)


def _round_up(x, m):
    return (x + m - 1) // m * m


def _mlp_kernel(x_ref, w1t_ref, w2t_ref, o_ref):
    # Fused hot path, all VMEM-resident:
    #   bf16 MXU matmul -> f32 sigmoid (EUP) -> bf16 MXU matmul -> f32 store.
    x_bf = x_ref[...].astype(jnp.bfloat16)
    h = jnp.dot(x_bf, w1t_ref[...], preferred_element_type=jnp.float32)
    h = jax.nn.sigmoid(h)                                   # keep f32 (v5e-safe)
    y = jnp.dot(h.astype(jnp.bfloat16), w2t_ref[...],
                preferred_element_type=jnp.float32)
    o_ref[...] = y.astype(o_ref.dtype)


def prepare_weights(w_in, w_out):
    """One-time prep (outside the hot path): transpose to [in, out] + cast bf16.

    w_in : [H, D_in]  (linear1.weight), w_out : [D_out, H]  (linear2.weight).
    Returns (w1t [D_in, H] bf16, w2t [H, D_out] bf16) — ~3 KB total.
    """
    h, _ = w_in.shape
    _, h2 = w_out.shape
    assert h == h2, "linear1 out dim must equal linear2 in dim"
    w1t = jnp.transpose(w_in).astype(jnp.bfloat16)
    w2t = jnp.transpose(w_out).astype(jnp.bfloat16)
    return w1t, w2t


@jax.jit
def dummy_network_forward(x, w1t, w2t):
    """x: [N, D_in] f32 -> y: [N, D_out] f32, with weights from prepare_weights."""
    n, d_in = x.shape
    d_in2, hid = w1t.shape
    hid2, d_out = w2t.shape
    assert d_in == d_in2 and hid == hid2

    # Row tile: a single tile covers small/medium batches exactly; cap at _MAX_TN.
    tn = _round_up(min(n, _MAX_TN), _SUBLANE)
    grid = (pl.cdiv(n, tn),)                 # ragged last tile handled by Pallas

    flops = 2 * n * (d_in * hid + hid * d_out)
    bytes_accessed = (4 * n * d_in + 4 * n * d_out          # x in, y out (f32)
                      + 2 * (d_in * hid + hid * d_out))     # bf16 weights
    cost = pl.CostEstimate(flops=flops, transcendentals=n * hid,
                           bytes_accessed=bytes_accessed)

    return pl.pallas_call(
        _mlp_kernel,
        out_shape=jax.ShapeDtypeStruct((n, d_out), jnp.float32),
        grid=grid,
        in_specs=[
            # x: streamed in row tiles; last dim == full D_in -> only real bytes DMA'd.
            pl.BlockSpec((tn, d_in), lambda i: (i, 0)),
            # Weights: grid-constant index_map -> VMEM-resident across the grid.
            pl.BlockSpec((d_in, hid), lambda i: (0, 0)),
            pl.BlockSpec((hid, d_out), lambda i: (0, 0)),
        ],
        out_specs=pl.BlockSpec((tn, d_out), lambda i: (i, 0)),
        compiler_params=pltpu.CompilerParams(
            dimension_semantics=("parallel",)),
        cost_estimate=cost,
    )(x, w1t, w2t)


if __name__ == "__main__":
    # Small shapes consistent with the module: D_in=32, H=32, D_out=16, batch N=8.
    N, D_in, H, D_out = 8, 32, 32, 16

    key = jax.random.PRNGKey(0)
    kx, kw1, kw2 = jax.random.split(key, 3)
    x = jax.random.normal(kx, (N, D_in), dtype=jnp.float32)
    w_in = jax.random.normal(kw1, (H, D_in), dtype=jnp.float32) * 0.1    # linear1.weight
    w_out = jax.random.normal(kw2, (D_out, H), dtype=jnp.float32) * 0.1  # linear2.weight

    # One-time weight prep (outside the per-call hot path).
    w1t, w2t = prepare_weights(w_in, w_out)

    y = dummy_network_forward(x, w1t, w2t)
    y = jax.block_until_ready(y)

    # Reference check in plain JAX (same math as the PyTorch forward, f32).
    y_ref = jax.nn.sigmoid(x @ w_in.T) @ w_out.T
    assert y.shape == (N, D_out)
    # bf16 MXU inputs + f32 accumulation -> loosened tolerance vs the f32 reference.
    assert jnp.allclose(y, y_ref, atol=1e-2, rtol=1e-2), float(jnp.max(jnp.abs(y - y_ref)))

    print("KERNEL_OK")
</pallas_src>

<mosaic_0001>
module attributes {stable_mosaic.version = 11 : i64} {
  func.func @_mlp_kernel(%arg0: i32, %arg1: memref<8x32xf32, #tpu.memory_space<vmem>>, %arg2: memref<32x32xbf16, #tpu.memory_space<vmem>>, %arg3: memref<32x16xbf16, #tpu.memory_space<vmem>>, %arg4: memref<8x16xf32, #tpu.memory_space<vmem>>) attributes {dimension_semantics = [#tpu.dimension_semantics<parallel>], iteration_bounds = array<i64: 1>, scalar_prefetch = 0 : i64, scratch_operands = 0 : i64, tpu.core_type = #tpu.core_type<tc>, window_params = [{transform_indices = @transform_0, window_bounds = array<i64: 8, 32>}, {pipeline_mode = #tpu.pipeline_mode<synchronous>, transform_indices = @transform_1, window_bounds = array<i64: 32, 32>}, {pipeline_mode = #tpu.pipeline_mode<synchronous>, transform_indices = @transform_2, window_bounds = array<i64: 32, 16>}, {transform_indices = @transform_3, window_bounds = array<i64: 8, 16>}]} {
    %c0 = arith.constant 0 : index
    %c0_0 = arith.constant 0 : index
    %0 = vector.load %arg1[%c0, %c0_0] : memref<8x32xf32, #tpu.memory_space<vmem>>, vector<8x32xf32>
    %1 = arith.truncf %0 : vector<8x32xf32> to vector<8x32xbf16>
    %c0_1 = arith.constant 0 : index
    %c0_2 = arith.constant 0 : index
    %2 = vector.load %arg2[%c0_1, %c0_2] : memref<32x32xbf16, #tpu.memory_space<vmem>>, vector<32x32xbf16>
    %cst = arith.constant dense<0.000000e+00> : vector<8x32xf32>
    %3 = tpu.matmul %1, %2, %cst {dimension_numbers = #tpu.dot_dimension_numbers<[1], [0], [0], [1], [0, 0, 1, 1], [], []>} : vector<8x32xbf16>, vector<32x32xbf16>, vector<8x32xf32> -> vector<8x32xf32>
    %4 = arith.negf %3 : vector<8x32xf32>
    %5 = math.exp %4 : vector<8x32xf32>
    %cst_3 = arith.constant 1.000000e+00 : f32
    %6 = vector.broadcast %cst_3 : f32 to vector<8x32xf32>
    %7 = arith.addf %6, %5 : vector<8x32xf32>
    %8 = arith.divf %6, %7 : vector<8x32xf32>
    %9 = arith.truncf %8 : vector<8x32xf32> to vector<8x32xbf16>
    %c0_4 = arith.constant 0 : index
    %c0_5 = arith.constant 0 : index
    %10 = vector.load %arg3[%c0_4, %c0_5] : memref<32x16xbf16, #tpu.memory_space<vmem>>, vector<32x16xbf16>
    %cst_6 = arith.constant dense<0.000000e+00> : vector<8x16xf32>
    %11 = tpu.matmul %9, %10, %cst_6 {dimension_numbers = #tpu.dot_dimension_numbers<[1], [0], [0], [1], [0, 0, 1, 1], [], []>} : vector<8x32xbf16>, vector<32x16xbf16>, vector<8x16xf32> -> vector<8x16xf32>
    %c0_7 = arith.constant 0 : index
    %c0_8 = arith.constant 0 : index
    %12 = vector.load %arg4[%c0_7, %c0_8] : memref<8x16xf32, #tpu.memory_space<vmem>>, vector<8x16xf32>
    tpu.vector_store %arg4[%c0_7, %c0_8], %11 {strides = array<i32>} : memref<8x16xf32, #tpu.memory_space<vmem>>, vector<8x16xf32>,
    return
  }
  func.func @transform_0(%arg0: i32) -> (i32, i32) {
    %c0_i32 = arith.constant 0 : i32
    %c0_i32_0 = arith.constant 0 : i32
    return %arg0, %c0_i32 : i32, i32
  }
  func.func @transform_1(%arg0: i32) -> (i32, i32) {
    %c0_i32 = arith.constant 0 : i32
    %c0_i32_0 = arith.constant 0 : i32
    %c0_i32_1 = arith.constant 0 : i32
    return %c0_i32, %c0_i32_0 : i32, i32
  }
  func.func @transform_2(%arg0: i32) -> (i32, i32) {
    %c0_i32 = arith.constant 0 : i32
    %c0_i32_0 = arith.constant 0 : i32
    %c0_i32_1 = arith.constant 0 : i32
    return %c0_i32, %c0_i32_0 : i32, i32
  }
  func.func @transform_3(%arg0: i32) -> (i32, i32) {
    %c0_i32 = arith.constant 0 : i32
    %c0_i32_0 = arith.constant 0 : i32
    return %arg0, %c0_i32 : i32, i32
  }
}

</mosaic_0001>

<llo_original>
// kernel: dummy_network_forward.1
$region0: #{dummy_network_forward.1}
  #allocation0 [shape = 'u32[]', space=smem, size = 0x4, offset = 0x4, fixed_abs, tag = 'smem constant byte address 0x4 - core index']
  #allocation1 [shape = 'u32[72,128]{1,0:T(1,128)}', space=vmem, size = 0x9000, scoped, tag = 'internal scratch']
  %s0 = inlined_call_operand.vmem [shape: f32[8,32], index: 0, kind: input, shape index: {}]
  %s1 = inlined_call_operand.vmem [shape: bf16[32,32], index: 1, kind: input, shape index: {}]
  %s2 = inlined_call_operand.vmem [shape: bf16[32,16], index: 2, kind: input, shape index: {}]
  %s3 = inlined_call_operand.hbm [shape: f32[8,16], index: 3, kind: output, shape index: {}]
  %s4 = sld [smem:[#allocation0]]
  $region22: #{dummy_network_forward.1} parent=0
    _
  %s6 = ssub.s32 1, %s4
  %s7 = scalar_select 0, %s6, %s4
  $region1: #{dummy_network_forward.1} parent=0
    #allocation2 [shape = 'u8[4096]{0}', space=vmem, size = 0x1000, scoped, tag = 'output window, operand 0, single buffered']
    #allocation3 [shape = 's32[1]{0}', space=sflag, size = 0x4, scoped, tag = 'scoped memory for dummy_network_forward.1']
    %8 = vsyncpa [#allocation3], 0
    // Predicated region
    $region2: #{dummy_network_forward.1} parent=1 // pred_check
      _
    $region3: #{dummy_network_forward.1} parent=1 // pred_check_branch
      %10 = sbr.rel (0) target = $region5
    $region4: #{dummy_network_forward.1} parent=1 // pred_region
      _
    $region5: #{dummy_network_forward.1} parent=1 // pred_fallthru
      _
    // Predicated region
    $region6: #{dummy_network_forward.1} parent=1 // pred_check
      _
    $region7: #{dummy_network_forward.1} parent=1 // pred_check_branch
      %12 = sbr.rel (0) target = $region9
    $region8: #{dummy_network_forward.1} parent=1 // pred_region
      _
    $region9: #{dummy_network_forward.1} parent=1 // pred_fallthru
      _
    // Predicated region
    $region10: #{dummy_network_forward.1} parent=1 // pred_check
      _
    $region11: #{dummy_network_forward.1} parent=1 // pred_check_branch
      %14 = sbr.rel (0) target = $region13
    $region12: #{dummy_network_forward.1} parent=1 // pred_region
      _
    $region13: #{dummy_network_forward.1} parent=1 // pred_fallthru
      _
    %v16 = vld [vmem:[%s0] sm:$0xff]
    %v17 = vpack.c.bf16 %v16, %v16
    %v18 = vld [vmem:[%s1] sm:$0xf]
    %v19 = vld [vmem:[%s1 + $0x4] sm:$0xf]
    %v20 = vld [vmem:[%s1 + $0x8] sm:$0xf]
    %v21 = vld [vmem:[%s1 + $0xc] sm:$0xf]
    %v26 = vunpack.c.l.b16 %v18
    %v27 = vunpack.c.l.b16 %v19
    %v28 = vunpack.c.l.b16 %v20
    %v29 = vunpack.c.l.b16 %v21
    %v30 = vpack.c.b16 %v27, %v26
    %v31 = vpack.c.b16 %v29, %v28
    %vm34 = vcmask 261120
    %v36 = vsel %vm34, %v17, 0
    %38 = vmatpush.bf16.msra.mxu0 0
    %39 = vmatpush.bf16.msra.mxu0 0
    %40 = vmatpush.bf16.msra.mxu0 0
    %41 = vmatpush.bf16.msra.mxu0 0
    %42 = vmatpush.bf16.msra.mxu0 0
    %43 = vmatpush.bf16.msra.mxu0 0
    %44 = vmatpush.bf16.msra.mxu0 %v31
    %45 = vmatpush.bf16.msra.mxu0 %v30
    %46 = vmatmul.bf16.gmra.mxu0 %v36
    %v47 = vpop.f32.mrf.mxu0
    %v48 = vadd.f32 0.0, %v47
    %v49 = vpop.f32.mrf.mxu0
    %50 = vdwg.mxu0
    %v51 = vxor.u32 %v48, 2147483648
    %v52 = vmul.f32 %v51, 1.442695
    %v53 = vpow.pop %v52
    %v54 = vadd.f32 %v53, 1.0
    %v55 = vrcp.pop %v54
    %v56 = vmul.f32 %v54, %v55
    %v57 = vsub.f32 1.0, %v56
    %v58 = vmul.f32 %v55, %v57
    %v59 = vadd.f32 %v55, %v58
    %vm60 = vweird.f32 %v54
    %vm61 = vweird.f32 %v55
    %vm62 = vmor %vm60, %vm61
    %v63 = vsel %vm62, %v55, %v59
    %v64 = vand.u32 2147483647, %v54
    %vm65 = vcmp.eq.f32.partialorder %v64, 8.507059e+37
    %v66 = vand.u32 %v54, 2147483648
    %v67 = vor.u32 1.1754944e-38, %v66
    %v68 = vsel %vm65, %v67, %v63
    %v69 = vmul.f32 1.0, %v68
    %v70 = vpack.c.bf16 %v69, %v69
    %v71 = vld [vmem:[%s2] sm:$0xf]
    %v72 = vld [vmem:[%s2 + $0x4] sm:$0xf]
    %v73 = vld [vmem:[%s2 + $0x8] sm:$0xf]
    %v74 = vld [vmem:[%s2 + $0xc] sm:$0xf]
    %v79 = vunpack.c.l.b16 %v71
    %v80 = vunpack.c.l.b16 %v72
    %v81 = vunpack.c.l.b16 %v73
    %v82 = vunpack.c.l.b16 %v74
    %v83 = vpack.c.b16 %v80, %v79
    %v84 = vpack.c.b16 %v82, %v81
    %v88 = vsel %vm34, %v70, 0
    %90 = vmatpush.bf16.msra.mxu0 0
    %91 = vmatpush.bf16.msra.mxu0 0
    %92 = vmatpush.bf16.msra.mxu0 0
    %93 = vmatpush.bf16.msra.mxu0 0
    %94 = vmatpush.bf16.msra.mxu0 0
    %95 = vmatpush.bf16.msra.mxu0 0
    %96 = vmatpush.bf16.msra.mxu0 %v84
    %97 = vmatpush.bf16.msra.mxu0 %v83
    %98 = vmatmul.bf16.gmra.mxu0 %v88
    %v99 = vpop.f32.mrf.mxu0
    %v100 = vadd.f32 0.0, %v99
    %v101 = vpop.f32.mrf.mxu0
    %102 = vdwg.mxu0
    %vm103 = vcmask 130048
    %104 = vst.msk [vmem:[#allocation2] sm:$0xff] %vm103, %v100
    // Predicated region
    $region14: #{dummy_network_forward.1} parent=1 // pred_check
      _
    $region15: #{dummy_network_forward.1} parent=1 // pred_check_branch
      %106 = sbr.rel (0) target = $region17
    $region16: #{dummy_network_forward.1} parent=1 // pred_region
      %108 = vsyncadd [#allocation3], 0
      %s110 = sshll.u32 [#allocation2], 4
      %s111 = int_to_ptr.vmem [resolvable:$true] %s110
      %s112 = sshll.u32 %s3, 4
      %s113 = int_to_ptr.hbm [resolvable:$true] %s112
      %115 = dma.vmem_to_hbm [thread:$0]  %s111, 128, %s113, [#allocation3]
    $region17: #{dummy_network_forward.1} parent=1 // pred_fallthru
      _
    // Predicated region
    $region18: #{dummy_network_forward.1} parent=1 // pred_check
      _
    $region19: #{dummy_network_forward.1} parent=1 // pred_check_branch
      %117 = sbr.rel (0) target = $region21
    $region20: #{dummy_network_forward.1} parent=1 // pred_region
      %119 = dma.done [#allocation3], 128
    $region21: #{dummy_network_forward.1} parent=1 // pred_fallthru
      _
    %120 = vsyncpa [#allocation3], 1

</llo_original>
